<compile_context>
chip_gen: v7x
topology: tpu7x:2x2x1
jax: 0.10.0
libtpu: 0.0.40
codegen_flags: <defaults>
</compile_context>

<pallas_src>
import math
import functools

import jax
import jax.numpy as jnp
from jax import lax
from jax.experimental import pallas as pl
from jax.experimental.pallas import tpu as pltpu


# ---------------------------------------------------------------------------
# Small helpers
# ---------------------------------------------------------------------------
def _round_up(x, m):
    return ((x + m - 1) // m) * m


def _pick_hw_tile(hw_pad, cap):
    """Largest multiple of 128 that divides hw_pad and is <= cap."""
    best, t = 128, 128
    limit = min(hw_pad, max(cap, 128))
    while t <= limit:
        if hw_pad % t == 0:
            best = t
        t += 128
    return best


def _compiler_params():
    cls = getattr(pltpu, "CompilerParams", None) or getattr(pltpu, "TPUCompilerParams")
    vmem_limit = 40 * 1024 * 1024          # safe on v7x (64 MiB physical)
    try:
        cap = getattr(pltpu.get_tpu_info(), "vmem_capacity_bytes", None)
        if cap:                            # v5e/v6e: ~70 MiB; v7x: ~35 MiB
            vmem_limit = min(int(cap * 0.55), 100 * 1024 * 1024)
    except Exception:
        pass
    return cls(dimension_semantics=("parallel", "parallel", "arbitrary"),
               vmem_limit_bytes=vmem_limit)


# ---------------------------------------------------------------------------
# Pallas kernel: one (group, batch, hw-tile) step
#   acc[:, tile] = Wcat @ [x_patches ; b_0*mask ; ... ; b_deg*mask]
#   last hw step: y = SiLU(InstanceNorm2d(acc))  (per channel over true HW)
# ---------------------------------------------------------------------------
def _kab_group_kernel(mask_ref, xpat_ref, wcat_ref, o_ref, acc_ref, *,
                      degree, hw_tile, hw_true, eps, apply_mask, mxu_dtype):
    # mask_ref : (Fb_pad, HW_pad)                 padding-validity mask (resident)
    # xpat_ref : (Fb_pad, hw_tile)                im2col of zero-padded raw x
    # wcat_ref : (Cout_gp, (degree+2)*Fb_pad)     stacked [base ; poly_0..poly_deg]
    # o_ref    : (Cout_gp, HW_pad)                model-dtype output (resident over t)
    # acc_ref  : (Cout_gp, HW_pad) f32            pre-norm accumulator scratch
    t = pl.program_id(2)
    col0 = pl.multiple_of(t * hw_tile, hw_tile)

    xp = xpat_ref[...]                                       # elem dtype

    # Bernstein basis via de Casteljau (faithful to the PyTorch recurrence).
    sig = jax.nn.sigmoid(xp)
    one_minus = 1.0 - sig
    b = [jnp.ones_like(sig) for _ in range(degree + 1)]
    for j in range(1, degree + 1):
        for k in range(degree + 1 - j):
            b[k] = b[k] * one_minus + b[k + 1] * sig

    # Patch entries that came from zero padding must contribute a ZERO basis
    # (the PyTorch conv pads the basis itself, while basis(sigmoid(0)) = 1).
    if apply_mask:
        m = mask_ref[:, pl.ds(col0, hw_tile)]
        b = [lvl * m for lvl in b]

    # Single fused matmul: RHS rows ordered exactly like the stacked weights.
    rhs = jnp.concatenate([xp] + b, axis=0).astype(mxu_dtype)
    acc_ref[:, pl.ds(col0, hw_tile)] = jnp.dot(
        wcat_ref[...], rhs, preferred_element_type=jnp.float32)

    # InstanceNorm2d (biased variance, no affine) + SiLU, once per (g, b).
    @pl.when(t == pl.num_programs(2) - 1)
    def _():
        acc = acc_ref[...]                                   # (Cout_gp, HW_pad) f32
        lane = lax.broadcasted_iota(jnp.int32, acc.shape, 1)
        vcol = (lane < hw_true).astype(jnp.float32)          # exclude HW pad lanes
        inv_n = 1.0 / hw_true
        mean = jnp.sum(acc * vcol, axis=1, keepdims=True) * inv_n
        centered = acc - mean
        var = jnp.sum(centered * centered * vcol, axis=1, keepdims=True) * inv_n
        y = centered * lax.rsqrt(var + eps)
        o_ref[...] = (y * jax.nn.sigmoid(y)).astype(o_ref.dtype)   # SiLU


# ---------------------------------------------------------------------------
# Wrapper glue (plain JAX): im2col of the RAW input only, weight stacking,
# static-shape padding mask, padding to TPU-friendly shapes.
# ---------------------------------------------------------------------------
def _im2col_raw(x, K, stride, padding, dilation):
    """x: (N, C, H, W) -> (N, C*K*K, Ho*Wo); rows ordered (c, ki, kj)."""
    xpad = jnp.pad(x, ((0, 0), (0, 0), (padding, padding), (padding, padding)))
    N, C, Hp, Wp = xpad.shape
    Ho = (Hp - dilation * (K - 1) - 1) // stride + 1
    Wo = (Wp - dilation * (K - 1) - 1) // stride + 1
    cols = []
    for ki in range(K):
        for kj in range(K):
            hs, ws = ki * dilation, kj * dilation
            cols.append(xpad[:, :, hs:hs + stride * (Ho - 1) + 1:stride,
                                   ws:ws + stride * (Wo - 1) + 1:stride])
    cols = jnp.stack(cols, axis=2)                    # (N, C, K*K, Ho, Wo)
    return cols.reshape(N, C * K * K, Ho * Wo), Ho, Wo


def _build_valid_mask(Cin_g, K, H, W, Ho, Wo, stride, padding, dilation,
                      Fb_pad, HW_pad, dtype):
    """(Fb_pad, HW_pad): 1 where the patch element came from the real image,
    0 where it came from zero padding; pad rows / pad lanes are 0."""
    kk = jnp.arange(K * K)
    ki, kj = kk // K, kk % K
    pos = jnp.arange(Ho * Wo)
    oi, oj = pos // Wo, pos % Wo
    ih = oi[None, :] * stride + ki[:, None] * dilation        # (KK, HW)
    iw = oj[None, :] * stride + kj[:, None] * dilation
    valid = ((ih >= padding) & (ih < H + padding) &
             (iw >= padding) & (iw < W + padding))
    valid = jnp.tile(valid, (Cin_g, 1)).astype(dtype)          # (Fb, HW)
    return jnp.pad(valid, ((0, Fb_pad - Cin_g * K * K), (0, HW_pad - Ho * Wo)))


def kabn_conv2d_forward(x, base_w, poly_w, *, degree, kernel_size, groups,
                        stride=1, padding=0, dilation=1, eps=1e-5,
                        mxu_dtype=jnp.bfloat16, elem_dtype=jnp.float32,
                        hw_tile_cap=2048):
    """x: (B, Cin, H, W); base_w: (G, Cout_g, Cin_g, K, K);
    poly_w: (G, Cout_g, Cin_g*(degree+1), K, K).  Returns (B, Cout, Ho, Wo)."""
    B, Cin, H, W = x.shape
    G = groups
    Cin_g = Cin // G
    Cout_g = base_w.shape[1]
    K = kernel_size
    KK = K * K
    Fb = Cin_g * KK
    Fb_pad = _round_up(Fb, 8)            # sublane-aligned contraction chunks
    Cout_gp = _round_up(Cout_g, 8)       # no wasted sublanes / MXU rows

    # --- im2col of the raw (zero-padded) input only; basis built in-kernel ---
    xg = x.reshape(B, G, Cin_g, H, W).transpose(1, 0, 2, 3, 4)
    xg = xg.reshape(G * B, Cin_g, H, W).astype(elem_dtype)
    xpat, Ho, Wo = _im2col_raw(xg, K, stride, padding, dilation)
    HW = Ho * Wo
    HW_pad = _round_up(HW, 128)
    hw_tile = _pick_hw_tile(HW_pad, hw_tile_cap)
    T = HW_pad // hw_tile
    xpat = xpat.reshape(G, B, Fb, HW)
    xpat = jnp.pad(xpat, ((0, 0), (0, 0), (0, Fb_pad - Fb), (0, HW_pad - HW)))

    # --- stacked weights: [base ; poly_0 .. poly_deg] along contraction axis -
    wb = base_w.reshape(G, Cout_g, Fb)
    wp = poly_w.reshape(G, Cout_g, Cin_g, degree + 1, KK)
    wp = wp.transpose(0, 3, 1, 2, 4).reshape(G, degree + 1, Cout_g, Fb)
    blocks = [wb] + [wp[:, d] for d in range(degree + 1)]
    blocks = [jnp.pad(w, ((0, 0), (0, Cout_gp - Cout_g), (0, Fb_pad - Fb)))
              for w in blocks]
    wcat = jnp.concatenate(blocks, axis=-1).astype(mxu_dtype)
    F_all = (degree + 2) * Fb_pad

    # --- padding-validity mask: static shapes only, DMA'd once, resident -----
    mask = _build_valid_mask(Cin_g, K, H, W, Ho, Wo, stride, padding, dilation,
                             Fb_pad, HW_pad, elem_dtype)

    kernel = functools.partial(
        _kab_group_kernel, degree=degree, hw_tile=hw_tile, hw_true=HW, eps=eps,
        apply_mask=(padding > 0), mxu_dtype=mxu_dtype)

    out = pl.pallas_call(
        kernel,
        out_shape=jax.ShapeDtypeStruct((G, B, Cout_gp, HW_pad), x.dtype),
        grid=(G, B, T),          # T innermost; weights & mask stay resident
        in_specs=[
            pl.BlockSpec((Fb_pad, HW_pad), lambda g, b, t: (0, 0)),
            pl.BlockSpec((None, None, Fb_pad, hw_tile),
                         lambda g, b, t: (g, b, 0, t)),
            pl.BlockSpec((None, Cout_gp, F_all), lambda g, b, t: (g, 0, 0)),
        ],
        out_specs=pl.BlockSpec((None, None, Cout_gp, HW_pad),
                               lambda g, b, t: (g, b, 0, 0)),
        scratch_shapes=[pltpu.VMEM((Cout_gp, HW_pad), jnp.float32)],
        compiler_params=_compiler_params(),
    )(mask, xpat, wcat)

    # (G, B, Cout_gp, HW_pad) -> (B, G*Cout_g, Ho, Wo): drop pads, permute
    # leading dims only (kernel's lane-dense tiles are untouched).
    out = out[:, :, :Cout_g, :HW]
    return out.transpose(1, 0, 2, 3).reshape(B, G * Cout_g, Ho, Wo)


# ---------------------------------------------------------------------------
# Pure-JAX reference (lax.conv) used only to sanity-check the kernel output
# ---------------------------------------------------------------------------
def _bernstein_poly_ref(x_sig, degree):
    """Faithful reproduction of KABNConvNDLayer.bernstein_poly."""
    b = [jnp.ones_like(x_sig) for _ in range(degree + 1)]
    for j in range(1, degree + 1):
        for k in range(degree + 1 - j):
            b[k] = b[k] * (1.0 - x_sig) + b[k + 1] * x_sig
    bern = jnp.stack(b, axis=2)                 # (B, C, deg+1, H, W)
    B, C = x_sig.shape[0], x_sig.shape[1]
    return bern.reshape(B, C * (degree + 1), *x_sig.shape[2:])


def _reference_forward(x, base_w, poly_w, degree, K, groups, stride, padding,
                       dilation, eps=1e-5):
    B, Cin, _, _ = x.shape
    G = groups
    Cin_g = Cin // G
    outs = []
    for g in range(G):
        xg = x[:, g * Cin_g:(g + 1) * Cin_g]
        dn = lax.conv_dimension_numbers(xg.shape, base_w[g].shape,
                                        ('NCHW', 'OIHW', 'NCHW'))
        base = lax.conv_general_dilated(xg, base_w[g], (stride, stride),
                                        [(padding, padding)] * 2,
                                        rhs_dilation=(dilation, dilation),
                                        dimension_numbers=dn)
        bern = _bernstein_poly_ref(jax.nn.sigmoid(xg), degree)
        dn2 = lax.conv_dimension_numbers(bern.shape, poly_w[g].shape,
                                         ('NCHW', 'OIHW', 'NCHW'))
        poly = lax.conv_general_dilated(bern, poly_w[g], (stride, stride),
                                        [(padding, padding)] * 2,
                                        rhs_dilation=(dilation, dilation),
                                        dimension_numbers=dn2)
        y = base + poly
        mean = y.mean(axis=(2, 3), keepdims=True)
        var = ((y - mean) ** 2).mean(axis=(2, 3), keepdims=True)
        y = (y - mean) * lax.rsqrt(var + eps)
        outs.append(y * jax.nn.sigmoid(y))
    return jnp.concatenate(outs, axis=1)


if __name__ == "__main__":
    # Module config: input_dim=4, output_dim=8, degree=3, kernel_size=3,
    # groups=2, padding=1, stride=1, dilation=1, ndim=2, dropout=0.
    B, Cin, H, W = 2, 4, 16, 16
    Cout, G, K, degree = 8, 2, 3, 3
    padding, stride, dilation = 1, 1, 1
    Cin_g, Cout_g = Cin // G, Cout // G

    key = jax.random.PRNGKey(0)
    k1, k2, k3 = jax.random.split(key, 3)
    x = jax.random.normal(k1, (B, Cin, H, W), jnp.float32)

    # kaiming_uniform_(nonlinearity='linear'): bound = sqrt(3 / fan_in)
    fan_base = Cin_g * K * K
    base_w = jax.random.uniform(k2, (G, Cout_g, Cin_g, K, K), jnp.float32,
                                -math.sqrt(3.0 / fan_base),
                                math.sqrt(3.0 / fan_base))
    # torch fan_in for the 5-D poly_weights param: size(1) * prod(size(2:))
    fan_poly = Cout_g * (Cin_g * (degree + 1)) * K * K
    poly_w = jax.random.uniform(k3, (G, Cout_g, Cin_g * (degree + 1), K, K),
                                jnp.float32,
                                -math.sqrt(3.0 / fan_poly),
                                math.sqrt(3.0 / fan_poly))

    y_ref = _reference_forward(x, base_w, poly_w, degree, K, G,
                               stride, padding, dilation)

    # f32 MXU path: tight correctness check against the pure-JAX reference.
    y32 = kabn_conv2d_forward(x, base_w, poly_w, degree=degree, kernel_size=K,
                              groups=G, stride=stride, padding=padding,
                              dilation=dilation, mxu_dtype=jnp.float32)
    y32 = jax.block_until_ready(y32)
    assert y32.shape == (B, Cout, H, W), y32.shape
    err32 = float(jnp.max(jnp.abs(y32 - y_ref)))
    assert err32 < 2e-3, f"f32 max err {err32}"

    # bf16 MXU path (default, halves matmul streaming traffic): loose check.
    ybf = kabn_conv2d_forward(x, base_w, poly_w, degree=degree, kernel_size=K,
                              groups=G, stride=stride, padding=padding,
                              dilation=dilation, mxu_dtype=jnp.bfloat16)
    ybf = jax.block_until_ready(ybf)
    errbf = float(jnp.max(jnp.abs(ybf - y_ref)))
    assert errbf < 1.5e-1, f"bf16 max err {errbf}"

    print("KERNEL_OK")
</pallas_src>

<mosaic_0001>
module attributes {stable_mosaic.version = 11 : i64} {
  func.func @_kab_group_kernel(%arg0: i32, %arg1: i32, %arg2: i32, %arg3: memref<24x256xf32, #tpu.memory_space<vmem>>, %arg4: memref<1x1x24x256xf32, #tpu.memory_space<vmem>>, %arg5: memref<1x8x120xf32, #tpu.memory_space<vmem>>, %arg6: memref<1x1x8x256xf32, #tpu.memory_space<vmem>>, %arg7: memref<8x256xf32, #tpu.memory_space<vmem>>) attributes {dimension_semantics = [#tpu.dimension_semantics<parallel>, #tpu.dimension_semantics<parallel>, #tpu.dimension_semantics<arbitrary>], iteration_bounds = array<i64: 2, 2, 1>, scalar_prefetch = 0 : i64, scratch_operands = 1 : i64, tpu.core_type = #tpu.core_type<tc>, window_params = [{pipeline_mode = #tpu.pipeline_mode<synchronous>, transform_indices = @transform_0, window_bounds = array<i64: 24, 256>}, {transform_indices = @transform_1, window_bounds = array<i64: 1, 1, 24, 256>}, {transform_indices = @transform_2, window_bounds = array<i64: 1, 8, 120>}, {transform_indices = @transform_3, window_bounds = array<i64: 1, 1, 8, 256>}]} {
    %c256_i32 = arith.constant 256 : i32
    %0 = arith.muli %arg2, %c256_i32 : i32
    %1 = tpu.assume_multiple %0, 256 : i32
    %c0 = arith.constant 0 : index
    %c0_0 = arith.constant 0 : index
    %c0_1 = arith.constant 0 : index
    %c0_2 = arith.constant 0 : index
    %2 = vector.load %arg4[%c0, %c0_0, %c0_1, %c0_2] : memref<1x1x24x256xf32, #tpu.memory_space<vmem>>, vector<1x1x24x256xf32>
    %3 = vector.shape_cast %2 : vector<1x1x24x256xf32> to vector<24x256xf32>
    %4 = arith.negf %3 : vector<24x256xf32>
    %5 = math.exp %4 : vector<24x256xf32>
    %cst = arith.constant 1.000000e+00 : f32
    %6 = vector.broadcast %cst : f32 to vector<24x256xf32>
    %7 = arith.addf %6, %5 : vector<24x256xf32>
    %8 = arith.divf %6, %7 : vector<24x256xf32>
    %cst_3 = arith.constant 1.000000e+00 : f32
    %9 = vector.broadcast %cst_3 : f32 to vector<24x256xf32>
    %10 = arith.subf %9, %8 : vector<24x256xf32>
    %cst_4 = arith.constant 1.000000e+00 : f32
    %11 = vector.broadcast %cst_4 : f32 to vector<24x256xf32>
    %cst_5 = arith.constant 1.000000e+00 : f32
    %12 = vector.broadcast %cst_5 : f32 to vector<24x256xf32>
    %cst_6 = arith.constant 1.000000e+00 : f32
    %13 = vector.broadcast %cst_6 : f32 to vector<24x256xf32>
    %cst_7 = arith.constant 1.000000e+00 : f32
    %14 = vector.broadcast %cst_7 : f32 to vector<24x256xf32>
    %15 = arith.mulf %11, %10 : vector<24x256xf32>
    %16 = arith.mulf %12, %8 : vector<24x256xf32>
    %17 = arith.addf %15, %16 : vector<24x256xf32>
    %18 = arith.mulf %12, %10 : vector<24x256xf32>
    %19 = arith.mulf %13, %8 : vector<24x256xf32>
    %20 = arith.addf %18, %19 : vector<24x256xf32>
    %21 = arith.mulf %13, %10 : vector<24x256xf32>
    %22 = arith.mulf %14, %8 : vector<24x256xf32>
    %23 = arith.addf %21, %22 : vector<24x256xf32>
    %24 = arith.mulf %17, %10 : vector<24x256xf32>
    %25 = arith.mulf %20, %8 : vector<24x256xf32>
    %26 = arith.addf %24, %25 : vector<24x256xf32>
    %27 = arith.mulf %20, %10 : vector<24x256xf32>
    %28 = arith.mulf %23, %8 : vector<24x256xf32>
    %29 = arith.addf %27, %28 : vector<24x256xf32>
    %30 = arith.mulf %26, %10 : vector<24x256xf32>
    %31 = arith.mulf %29, %8 : vector<24x256xf32>
    %32 = arith.addf %30, %31 : vector<24x256xf32>
    %c0_8 = arith.constant 0 : index
    %33 = arith.index_cast %1 : i32 to index
    %34 = vector.load %arg3[%c0_8, %33] : memref<24x256xf32, #tpu.memory_space<vmem>>, vector<24x256xf32>
    %35 = arith.mulf %32, %34 : vector<24x256xf32>
    %36 = arith.mulf %29, %34 : vector<24x256xf32>
    %37 = arith.mulf %23, %34 : vector<24x256xf32>
    %38 = arith.mulf %14, %34 : vector<24x256xf32>
    %39 = tpu.concatenate %3, %35, %36, %37, %38 in 0 : vector<24x256xf32>, vector<24x256xf32>, vector<24x256xf32>, vector<24x256xf32>, vector<24x256xf32> -> vector<120x256xf32>
    %c0_9 = arith.constant 0 : index
    %c0_10 = arith.constant 0 : index
    %c0_11 = arith.constant 0 : index
    %40 = vector.load %arg5[%c0_9, %c0_10, %c0_11] : memref<1x8x120xf32, #tpu.memory_space<vmem>>, vector<1x8x120xf32>
    %41 = vector.shape_cast %40 : vector<1x8x120xf32> to vector<8x120xf32>
    %cst_12 = arith.constant dense<0.000000e+00> : vector<8x256xf32>
    %42 = tpu.matmul %41, %39, %cst_12 {dimension_numbers = #tpu.dot_dimension_numbers<[1], [0], [0], [1], [0, 0, 1, 1], [], []>} : vector<8x120xf32>, vector<120x256xf32>, vector<8x256xf32> -> vector<8x256xf32>
    %c0_13 = arith.constant 0 : index
    %43 = arith.index_cast %1 : i32 to index
    %44 = vector.load %arg7[%c0_13, %43] : memref<8x256xf32, #tpu.memory_space<vmem>>, vector<8x256xf32>
    tpu.vector_store %arg7[%c0_13, %43], %42 {strides = array<i32>} : memref<8x256xf32, #tpu.memory_space<vmem>>, vector<8x256xf32>,
    %c0_i32 = arith.constant 0 : i32
    %45 = arith.cmpi eq, %arg2, %c0_i32 : i32
    %46 = arith.extui %45 : i1 to i32
    %c0_i32_14 = arith.constant 0 : i32
    %47 = arith.cmpi ne, %46, %c0_i32_14 : i32
    scf.if %47 {
      %c0_15 = arith.constant 0 : index
      %c0_16 = arith.constant 0 : index
      %48 = vector.load %arg7[%c0_15, %c0_16] : memref<8x256xf32, #tpu.memory_space<vmem>>, vector<8x256xf32>
      %49 = tpu.iota {dimensions = array<i32: 1>} : vector<8x256xi32>
      %c256_i32_17 = arith.constant 256 : i32
      %50 = vector.broadcast %c256_i32_17 : i32 to vector<8x256xi32>
      %51 = arith.cmpi slt, %49, %50 : vector<8x256xi32>
      %52 = arith.extui %51 : vector<8x256xi1> to vector<8x256xi32>
      %53 = arith.sitofp %52 : vector<8x256xi32> to vector<8x256xf32>
      %54 = arith.mulf %48, %53 : vector<8x256xf32>
      %cst_18 = arith.constant dense<0.000000e+00> : vector<8xf32>
      %55 = vector.multi_reduction <add>, %54, %cst_18 [1] : vector<8x256xf32> to vector<8xf32>
      %56 = vector.shape_cast %55 : vector<8xf32> to vector<8x1xf32>
      %cst_19 = arith.constant 3.906250e-03 : f32
      %57 = vector.broadcast %cst_19 : f32 to vector<8x1xf32>
      %58 = arith.mulf %56, %57 : vector<8x1xf32>
      %59 = vector.broadcast %58 : vector<8x1xf32> to vector<8x256xf32>
      %60 = arith.subf %48, %59 : vector<8x256xf32>
      %61 = arith.mulf %60, %60 : vector<8x256xf32>
      %62 = arith.mulf %61, %53 : vector<8x256xf32>
      %cst_20 = arith.constant dense<0.000000e+00> : vector<8xf32>
      %63 = vector.multi_reduction <add>, %62, %cst_20 [1] : vector<8x256xf32> to vector<8xf32>
      %64 = vector.shape_cast %63 : vector<8xf32> to vector<8x1xf32>
      %cst_21 = arith.constant 3.906250e-03 : f32
      %65 = vector.broadcast %cst_21 : f32 to vector<8x1xf32>
      %66 = arith.mulf %64, %65 : vector<8x1xf32>
      %cst_22 = arith.constant 9.99999974E-6 : f32
      %67 = vector.broadcast %cst_22 : f32 to vector<8x1xf32>
      %68 = arith.addf %66, %67 : vector<8x1xf32>
      %69 = math.rsqrt %68 : vector<8x1xf32>
      %70 = vector.broadcast %69 : vector<8x1xf32> to vector<8x256xf32>
      %71 = arith.mulf %60, %70 : vector<8x256xf32>
      %72 = arith.negf %71 : vector<8x256xf32>
      %73 = math.exp %72 : vector<8x256xf32>
      %cst_23 = arith.constant 1.000000e+00 : f32
      %74 = vector.broadcast %cst_23 : f32 to vector<8x256xf32>
      %75 = arith.addf %74, %73 : vector<8x256xf32>
      %76 = arith.divf %74, %75 : vector<8x256xf32>
      %77 = arith.mulf %71, %76 : vector<8x256xf32>
      %c0_24 = arith.constant 0 : index
      %c0_25 = arith.constant 0 : index
      %c0_26 = arith.constant 0 : index
      %c0_27 = arith.constant 0 : index
      %78 = vector.load %arg6[%c0_24, %c0_25, %c0_26, %c0_27] : memref<1x1x8x256xf32, #tpu.memory_space<vmem>>, vector<1x1x8x256xf32>
      %79 = vector.shape_cast %78 : vector<1x1x8x256xf32> to vector<8x256xf32>
      %80 = vector.shape_cast %77 : vector<8x256xf32> to vector<1x1x8x256xf32>
      tpu.vector_store %arg6[%c0_24, %c0_25, %c0_26, %c0_27], %80 {strides = array<i32>} : memref<1x1x8x256xf32, #tpu.memory_space<vmem>>, vector<1x1x8x256xf32>,
    } else {
    }
    return
  }
  func.func @transform_0(%arg0: i32, %arg1: i32, %arg2: i32) -> (i32, i32) {
    %c0_i32 = arith.constant 0 : i32
    %c0_i32_0 = arith.constant 0 : i32
    %c0_i32_1 = arith.constant 0 : i32
    return %c0_i32, %c0_i32_0 : i32, i32
  }
  func.func @transform_1(%arg0: i32, %arg1: i32, %arg2: i32) -> (i32, i32, i32, i32) {
    %c0_i32 = arith.constant 0 : i32
    %c0_i32_0 = arith.constant 0 : i32
    return %arg0, %arg1, %c0_i32, %arg2 : i32, i32, i32, i32
  }
  func.func @transform_2(%arg0: i32, %arg1: i32, %arg2: i32) -> (i32, i32, i32) {
    %c0_i32 = arith.constant 0 : i32
    %c0_i32_0 = arith.constant 0 : i32
    %c0_i32_1 = arith.constant 0 : i32
    return %arg0, %c0_i32, %c0_i32_0 : i32, i32, i32
  }
  func.func @transform_3(%arg0: i32, %arg1: i32, %arg2: i32) -> (i32, i32, i32, i32) {
    %c0_i32 = arith.constant 0 : i32
    %c0_i32_0 = arith.constant 0 : i32
    %c0_i32_1 = arith.constant 0 : i32
    return %arg0, %arg1, %c0_i32, %c0_i32_0 : i32, i32, i32, i32
  }
}

</mosaic_0001>

<llo_original>
// kernel: tpu_custom_call.1
$region0: #{tpu_custom_call.1}
  #allocation0 [shape = 'u32[]', space=smem, size = 0x4, offset = 0x4, fixed_abs, tag = 'smem constant byte address 0x4 - core index']
  #allocation1 [shape = 'u32[144,128]{1,0:T(1,128)}', space=vmem, size = 0x12000, scoped, tag = 'internal scratch']
  #allocation2 [shape = 'f32[8,256]{1,0:T(8,128)}', space=vmem, size = 0x2000, scoped, tag = 'scratch operand']
  %s0 = inlined_call_operand.hbm [shape: f32[24,256], index: 0, kind: input, shape index: {}]
  %s1 = inlined_call_operand.hbm [shape: f32[2,2,24,256], index: 1, kind: input, shape index: {}]
  %s2 = inlined_call_operand.hbm [shape: f32[2,8,120], index: 2, kind: input, shape index: {}]
  %s3 = inlined_call_operand.hbm [shape: f32[2,2,8,256], index: 3, kind: output, shape index: {}]
  %s4 = sld [smem:[#allocation0]]
  $region61: #{tpu_custom_call.1} parent=0
    _
  %s6 = ssub.s32 1, %s4
  %s7 = scalar_select 0, %s6, %s4
  $region1: #{tpu_custom_call.1} parent=0
    #allocation3 [shape = 'u8[24576]{0}', space=vmem, size = 0x6000, scoped, tag = 'input window, operand 0, single buffered']
    #allocation4 [shape = 's32[2]{0}', space=sflag, size = 0x8, scoped, tag = 'scoped memory for tpu_custom_call.1']
    #allocation5 [shape = 's32[2]{0}', space=sflag, size = 0x8, scoped, tag = 'scoped memory for tpu_custom_call.1']
    #allocation6 [shape = 'u8[49152]{0}', space=vmem, size = 0xc000, scoped, tag = 'input window, operand 1']
    #allocation7 [shape = 's32[2]{0}', space=sflag, size = 0x8, scoped, tag = 'scoped memory for tpu_custom_call.1']
    #allocation8 [shape = 'u8[8192]{0}', space=vmem, size = 0x2000, scoped, tag = 'input window, operand 2']
    #allocation9 [shape = 'u8[16384]{0}', space=vmem, size = 0x4000, scoped, tag = 'output window, operand 0']
    %8 = vsyncpa [#allocation4], 0
    %9 = vsyncpa [#allocation7], 0
    %s10 = scalar_lea.sflag [#allocation7], 1
    %11 = vsyncpa %s10, 0
    %12 = vsyncpa [#allocation5], 0
    %s13 = scalar_lea.sflag [#allocation5], 1
    %14 = vsyncpa %s13, 0
    loop: start=0, step=1, limit=6
    $region2: #{tpu_custom_call.1} parent=1 // loop_pre_header
      _
    $region3: #{tpu_custom_call.1} parent=1 // loop_header
      %s16 = sphi 0, %s20
      %p17 = scmp.ge.s32.totalorder %s16, 6
      %s23 = sphi 0, %s42
      %s24 = sphi 0, %s38
      %s25 = sphi 0, %s34
      %s26 = sphi 0, %s23
      %s27 = sphi 0, %s24
      %s28 = sphi 0, %s25
      %s29 = sphi 0, %s26
      %s30 = sphi 0, %s27
      %s31 = sphi 0, %s28
      %s43 = sphi 0, %s43
      %s45 = sphi 0, %s43
      %s46 = sphi 0, %s45
      %s60 = sphi 0, %s46
      %s70 = sphi 0, %s72
      %s73 = sphi 0, %s70
      %s74 = sphi 0, %s73
      %s90 = sphi 0, %s74
      %s96 = sphi 0, %s98
      %s99 = sphi 0, %s96
      %s100 = sphi 0, %s99
      %s116 = sphi 0, %s100
      %s124 = sphi 0, %s126
      %s127 = sphi 0, %s124
      %s128 = sphi 0, %s127
      %s144 = sphi 0, %s128
    $region4: #{tpu_custom_call.1} parent=1 // loop_header_branch
      %19 = sbr.rel (%p17) target = $region8
    $region5: #{tpu_custom_call.1} parent=1 // loop_body
      %s21 = ssub.s32 %s16, 1
      %s22 = ssub.s32 %s16, 2
      %s32 = sadd.s32 1, %s25
      %p33 = scmp.ge.s32.totalorder %s32, 1
      %s34 = scalar_select %p33, 0, %s32
      %s35 = sadd.s32 1, %s24
      %s36 = scalar_select %p33, %s35, %s24
      %p37 = scmp.ge.s32.totalorder %s36, 2
      %s38 = scalar_select %p37, 0, %s36
      %s39 = sadd.s32 1, %s23
      %s40 = scalar_select %p37, %s39, %s23
      %p41 = scmp.ge.s32.totalorder %s40, 2
      %s42 = scalar_select %p41, 0, %s40
      %s44 = sadd.s32 %s43, 1
      %p47 = scmp.eq.s32.totalorder %s16, 3
      %p48 = scmp.ne.s32.totalorder %s43, %s45
      %p49 = scmp.eq.s32.totalorder %s16, 0
      %p50 = por %p48, %p49
      %p51 = scmp.ne.s32.totalorder %s43, %s45
      %p52 = scmp.eq.s32.totalorder %s21, 3
      %p53 = por %p51, %p52
      %p54 = scmp.ne.s32.totalorder %s45, %s46
      %p55 = scmp.eq.s32.totalorder %s21, 0
      %p56 = por %p54, %p55
      %p57 = scmp.ne.s32.totalorder %s45, %s46
      %p58 = scmp.eq.s32.totalorder %s22, 3
      %p59 = por %p57, %p58
      %p61 = scmp.ne.s32.totalorder %s46, %s60
      %p62 = scmp.eq.s32.totalorder %s22, 0
      %p63 = por %p61, %p62
      %s64 = ssub.s32 %s23, %s42
      %s65 = ssub.s32 %s24, %s38
      %s66 = sor.u32 %s64, %s65
      %s67 = ssub.s32 %s25, %s34
      %s68 = sor.u32 %s66, %s67
      %p69 = scmp.eq.s32.totalorder %s68, 0
      %s71 = sadd.s32 %s70, 1
      %s72 = scalar_select %p69, %s70, %s71
      %p75 = pneg %p69
      %p76 = scmp.eq.s32.totalorder %s16, 3
      %p77 = por %p75, %p76
      %p78 = scmp.ne.s32.totalorder %s70, %s73
      %p79 = scmp.eq.s32.totalorder %s16, 0
      %p80 = por %p78, %p79
      %p81 = scmp.ne.s32.totalorder %s70, %s73
      %p82 = scmp.eq.s32.totalorder %s21, 3
      %p83 = por %p81, %p82
      %p84 = scmp.ne.s32.totalorder %s73, %s74
      %p85 = scmp.eq.s32.totalorder %s21, 0
      %p86 = por %p84, %p85
      %p87 = scmp.ne.s32.totalorder %s73, %s74
      %p88 = scmp.eq.s32.totalorder %s22, 3
      %p89 = por %p87, %p88
      %p91 = scmp.ne.s32.totalorder %s74, %s90
      %p92 = scmp.eq.s32.totalorder %s22, 0
      %p93 = por %p91, %p92
      %s94 = ssub.s32 %s23, %s42
      %p95 = scmp.eq.s32.totalorder %s94, 0
      %s97 = sadd.s32 %s96, 1
      %s98 = scalar_select %p95, %s96, %s97
      %p101 = pneg %p95
      %p102 = scmp.eq.s32.totalorder %s16, 3
      %p103 = por %p101, %p102
      %p104 = scmp.ne.s32.totalorder %s96, %s99
      %p105 = scmp.eq.s32.totalorder %s16, 0
      %p106 = por %p104, %p105
      %p107 = scmp.ne.s32.totalorder %s96, %s99
      %p108 = scmp.eq.s32.totalorder %s21, 3
      %p109 = por %p107, %p108
      %p110 = scmp.ne.s32.totalorder %s99, %s100
      %p111 = scmp.eq.s32.totalorder %s21, 0
      %p112 = por %p110, %p111
      %p113 = scmp.ne.s32.totalorder %s99, %s100
      %p114 = scmp.eq.s32.totalorder %s22, 3
      %p115 = por %p113, %p114
      %p117 = scmp.ne.s32.totalorder %s100, %s116
      %p118 = scmp.eq.s32.totalorder %s22, 0
      %p119 = por %p117, %p118
      %s120 = ssub.s32 %s23, %s42
      %s121 = ssub.s32 %s24, %s38
      %s122 = sor.u32 %s120, %s121
      %p123 = scmp.eq.s32.totalorder %s122, 0
      %s125 = sadd.s32 %s124, 1
      %s126 = scalar_select %p123, %s124, %s125
      %p129 = pneg %p123
      %p130 = scmp.eq.s32.totalorder %s16, 3
      %p131 = por %p129, %p130
      %p132 = scmp.ne.s32.totalorder %s124, %s127
      %p133 = scmp.eq.s32.totalorder %s16, 0
      %p134 = por %p132, %p133
      %p135 = scmp.ne.s32.totalorder %s124, %s127
      %p136 = scmp.eq.s32.totalorder %s21, 3
      %p137 = por %p135, %p136
      %p138 = scmp.ne.s32.totalorder %s127, %s128
      %p139 = scmp.eq.s32.totalorder %s21, 0
      %p140 = por %p138, %p139
      %p141 = scmp.ne.s32.totalorder %s127, %s128
      %p142 = scmp.eq.s32.totalorder %s22, 3
      %p143 = por %p141, %p142
      %p145 = scmp.ne.s32.totalorder %s128, %s144
      %p146 = scmp.eq.s32.totalorder %s22, 0
      %p147 = por %p145, %p146
      %p148 = scmp.le.s32.totalorder 1, %s16
      %p149 = scmp.lt.s32.totalorder %s16, 5
      %p150 = pnand %p148, %p149
      %p151 = pneg %p150
      // Predicated region
      $region9: #{tpu_custom_call.1} parent=5 // pred_check
        _
      $region10: #{tpu_custom_call.1} parent=5 // pred_check_branch
        %153 = sbr.rel (%p150) target = $region12
      $region11: #{tpu_custom_call.1} parent=5 // pred_region
        %s154 = ssub.s32 %s16, 1
        // Predicated region
        $region13: #{tpu_custom_call.1} parent=11 // pred_check
          %p155 = pneg %p56
        $region14: #{tpu_custom_call.1} parent=11 // pred_check_branch
          %157 = sbr.rel (%p155) target = $region16
        $region15: #{tpu_custom_call.1} parent=11 // pred_region
          %s159 = ssub.s32 768, 768
          %160 = vsyncadd [#allocation4], %s159
          %s161 = sshll.u32 [#allocation3], 4
          %s162 = int_to_ptr.vmem [resolvable:$true] %s161
          %167 = dma.hbm_to_vmem [thread:$0]  %s0, 768, %s162, [#allocation4], 256, 256, 16
        $region16: #{tpu_custom_call.1} parent=11 // pred_fallthru
          _
      $region12: #{tpu_custom_call.1} parent=5 // pred_fallthru
        _
      %p168 = scmp.lt.s32.totalorder %s16, 4
      // Predicated region
      $region17: #{tpu_custom_call.1} parent=5 // pred_check
        %p169 = pneg %p168
      $region18: #{tpu_custom_call.1} parent=5 // pred_check_branch
        %171 = sbr.rel (%p169) target = $region20
      $region19: #{tpu_custom_call.1} parent=5 // pred_region
        // Predicated region
        $region21: #{tpu_custom_call.1} parent=19 // pred_check
          %p172 = pneg %p80
        $region22: #{tpu_custom_call.1} parent=19 // pred_check_branch
          %174 = sbr.rel (%p172) target = $region24
        $region23: #{tpu_custom_call.1} parent=19 // pred_region
          %s175 = sand.u32 %s16, 1
          %s176 = scalar_lea.sflag [#allocation7], %s175
          %s177 = sand.u32 %s70, 1
          %s178 = smul.addr %s177, 48
          %s179 = scalar_lea.vmem [#allocation6], %s178
          %s180 = smul.u32 2, %s25
          %s182 = ssub.s32 768, 768
          %183 = vsyncadd %s176, %s182
          %s184 = smul.addr %s24, 6
          %s185 = sadd.s32 %s180, %s184
          %s186 = smul.addr %s23, 12
          %s187 = sadd.s32 %s185, %s186
          %s188 = smul.addr %s187, 128
          %s189 = scalar_lea.hbm %s1, %s188
          %s190 = sshll.u32 %s179, 4
          %s191 = int_to_ptr.vmem [resolvable:$true] %s190
          %196 = dma.hbm_to_vmem [thread:$0]  %s189, 768, %s191, %s176, 256, 256, 16
        $region24: #{tpu_custom_call.1} parent=19 // pred_fallthru
          _
        // Predicated region
        $region25: #{tpu_custom_call.1} parent=19 // pred_check
          %p197 = pneg %p106
        $region26: #{tpu_custom_call.1} parent=19 // pred_check_branch
          %199 = sbr.rel (%p197) target = $region28
        $region27: #{tpu_custom_call.1} parent=19 // pred_region
          %s200 = sand.u32 %s16, 1
          %s201 = scalar_lea.sflag [#allocation7], %s200
          %s202 = sand.u32 %s96, 1
          %s203 = smul.addr %s202, 8
          %s204 = scalar_lea.vmem [#allocation8], %s203
          %s206 = ssub.s32 128, 128
          %207 = vsyncadd %s201, %s206
          %s208 = smul.addr %s23, 128
          %s209 = scalar_lea.hbm %s2, %s208
          %s211 = sshll.u32 %s204, 4
          %s212 = int_to_ptr.vmem [resolvable:$true] %s211
          %214 = dma.hbm_to_vmem [thread:$0]  %s209, 128, %s212, %s201
        $region28: #{tpu_custom_call.1} parent=19 // pred_fallthru
          _
      $region20: #{tpu_custom_call.1} parent=5 // pred_fallthru
        _
      %p215 = scmp.le.s32.totalorder 1, %s16
      %p216 = scmp.lt.s32.totalorder %s16, 5
      %p217 = pnand %p215, %p216
      %p218 = pneg %p217
      // Predicated region
      $region29: #{tpu_custom_call.1} parent=5 // pred_check
        _
      $region30: #{tpu_custom_call.1} parent=5 // pred_check_branch
        %220 = sbr.rel (%p217) target = $region32
      $region31: #{tpu_custom_call.1} parent=5 // pred_region
        %s221 = ssub.s32 %s16, 1
        // Predicated region
        $region33: #{tpu_custom_call.1} parent=31 // pred_check
          %p222 = pneg %p56
        $region34: #{tpu_custom_call.1} parent=31 // pred_check_branch
          %224 = sbr.rel (%p222) target = $region36
        $region35: #{tpu_custom_call.1} parent=31 // pred_region
          %225 = dma.done [#allocation4], 768
        $region36: #{tpu_custom_call.1} parent=31 // pred_fallthru
          _
        %s226 = sand.u32 %s21, 1
        %s227 = scalar_lea.sflag [#allocation7], %s226
        %s228 = sand.u32 %s73, 1
        %s229 = smul.addr %s228, 48
        %s230 = scalar_lea.vmem [#allocation6], %s229
        // Predicated region
        $region37: #{tpu_custom_call.1} parent=31 // pred_check
          %p231 = pneg %p86
        $region38: #{tpu_custom_call.1} parent=31 // pred_check_branch
          %233 = sbr.rel (%p231) target = $region40
        $region39: #{tpu_custom_call.1} parent=31 // pred_region
          %234 = dma.done %s227, 768
        $region40: #{tpu_custom_call.1} parent=31 // pred_fallthru
          _
        %s235 = sand.u32 %s21, 1
        %s236 = scalar_lea.sflag [#allocation7], %s235
        %s237 = sand.u32 %s99, 1
        %s238 = smul.addr %s237, 8
        %s239 = scalar_lea.vmem [#allocation8], %s238
        // Predicated region
        $region41: #{tpu_custom_call.1} parent=31 // pred_check
          %p240 = pneg %p112
        $region42: #{tpu_custom_call.1} parent=31 // pred_check_branch
          %242 = sbr.rel (%p240) target = $region44
        $region43: #{tpu_custom_call.1} parent=31 // pred_region
          %243 = dma.done %s236, 128
        $region44: #{tpu_custom_call.1} parent=31 // pred_fallthru
          _
        %p244 = pneg %p56
        %p245 = pneg %p53
        %s246 = sand.u32 %s21, 1
        %s247 = scalar_lea.sflag [#allocation7], %s246
        %s248 = sand.u32 %s73, 1
        %s249 = smul.addr %s248, 48
        %s250 = scalar_lea.vmem [#allocation6], %s249
        %p251 = pneg %p86
        %p252 = pneg %p83
        %s253 = sand.u32 %s21, 1
        %s254 = scalar_lea.sflag [#allocation7], %s253
        %s255 = sand.u32 %s99, 1
        %s256 = smul.addr %s255, 8
        %s257 = scalar_lea.vmem [#allocation8], %s256
        %p258 = pneg %p112
        %p259 = pneg %p109
        %p260 = pneg %p140
        %p261 = pneg %p137
        %s262 = sand.u32 %s127, 1
        %s263 = scalar_lea.sflag [#allocation5], %s262
        %s264 = sand.u32 %s127, 1
        %s265 = smul.addr %s264, 16
        %s266 = scalar_lea.vmem [#allocation9], %s265
        %s267 = smul.u32 2, %s28
        %s268 = smul.u32 %s28, 256
        %v269 = vld [vmem:[%s230] sm:$0xff]
        %v270 = vld [vmem:[%s230 + $0x8] sm:$0xff]
        %v271 = vld [vmem:[%s230 + $0x10] sm:$0xff]
        %v272 = vld [vmem:[%s230 + $0x18] sm:$0xff]
        %v273 = vld [vmem:[%s230 + $0x20] sm:$0xff]
        %v274 = vld [vmem:[%s230 + $0x28] sm:$0xff]
        %v275 = vxor.u32 %v269, 2147483648
        %v276 = vxor.u32 %v270, 2147483648
        %v277 = vxor.u32 %v271, 2147483648
        %v278 = vxor.u32 %v272, 2147483648
        %v279 = vxor.u32 %v273, 2147483648
        %v280 = vxor.u32 %v274, 2147483648
        %v281 = vmul.f32 %v275, 1.442695
        %v282 = vpow.pop %v281
        %v283 = vmul.f32 %v276, 1.442695
        %v284 = vpow.pop %v283
        %v285 = vmul.f32 %v277, 1.442695
        %v286 = vpow.pop %v285
        %v287 = vmul.f32 %v278, 1.442695
        %v288 = vpow.pop %v287
        %v289 = vmul.f32 %v279, 1.442695
        %v290 = vpow.pop %v289
        %v291 = vmul.f32 %v280, 1.442695
        %v292 = vpow.pop %v291
        %v293 = vadd.f32 %v282, 1.0
        %v294 = vadd.f32 %v284, 1.0
        %v295 = vadd.f32 %v286, 1.0
        %v296 = vadd.f32 %v288, 1.0
        %v297 = vadd.f32 %v290, 1.0
        %v298 = vadd.f32 %v292, 1.0
        %v299 = vrcp.pop %v293
        %v300 = vmul.f32 1.0, %v299
        %v301 = vrcp.pop %v294
        %v302 = vmul.f32 1.0, %v301
        %v303 = vrcp.pop %v295
        %v304 = vmul.f32 1.0, %v303
        %v305 = vrcp.pop %v296
        %v306 = vmul.f32 1.0, %v305
        %v307 = vrcp.pop %v297
        %v308 = vmul.f32 1.0, %v307
        %v309 = vrcp.pop %v298
        %v310 = vmul.f32 1.0, %v309
        %v311 = vsub.f32 1.0, %v300
        %v312 = vsub.f32 1.0, %v302
        %v313 = vsub.f32 1.0, %v304
        %v314 = vsub.f32 1.0, %v306
        %v315 = vsub.f32 1.0, %v308
        %v316 = vsub.f32 1.0, %v310
        %v317 = vadd.f32 %v311, %v300
        %v318 = vadd.f32 %v312, %v302
        %v319 = vadd.f32 %v313, %v304
        %v320 = vadd.f32 %v314, %v306
        %v321 = vadd.f32 %v315, %v308
        %v322 = vadd.f32 %v316, %v310
        %v323 = vmul.f32 %v317, %v311
        %v324 = vmul.f32 %v318, %v312
        %v325 = vmul.f32 %v319, %v313
        %v326 = vmul.f32 %v320, %v314
        %v327 = vmul.f32 %v321, %v315
        %v328 = vmul.f32 %v322, %v316
        %v329 = vmul.f32 %v317, %v300
        %v330 = vmul.f32 %v318, %v302
        %v331 = vmul.f32 %v319, %v304
        %v332 = vmul.f32 %v320, %v306
        %v333 = vmul.f32 %v321, %v308
        %v334 = vmul.f32 %v322, %v310
        %v335 = vadd.f32 %v323, %v329
        %v336 = vadd.f32 %v324, %v330
        %v337 = vadd.f32 %v325, %v331
        %v338 = vadd.f32 %v326, %v332
        %v339 = vadd.f32 %v327, %v333
        %v340 = vadd.f32 %v328, %v334
        %v341 = vmul.f32 %v335, %v311
        %v342 = vmul.f32 %v336, %v312
        %v343 = vmul.f32 %v337, %v313
        %v344 = vmul.f32 %v338, %v314
        %v345 = vmul.f32 %v339, %v315
        %v346 = vmul.f32 %v340, %v316
        %v347 = vmul.f32 %v335, %v300
        %v348 = vmul.f32 %v336, %v302
        %v349 = vmul.f32 %v337, %v304
        %v350 = vmul.f32 %v338, %v306
        %v351 = vmul.f32 %v339, %v308
        %v352 = vmul.f32 %v340, %v310
        %v353 = vadd.f32 %v341, %v347
        %v354 = vadd.f32 %v342, %v348
        %v355 = vadd.f32 %v343, %v349
        %v356 = vadd.f32 %v344, %v350
        %v357 = vadd.f32 %v345, %v351
        %v358 = vadd.f32 %v346, %v352
        %s359 = sshra.s32 %s268, 7
        %s360 = sand.u32 %s268, 127
        %s361 = smul.addr %s359, 8
        %s362 = scalar_lea.vmem [#allocation3], %s361
        %v363 = vld [vmem:[%s362] sm:$0xff]
        %v364 = vld [vmem:[%s362 + $0x8] sm:$0xff]
        %v365 = vld [vmem:[%s362 + $0x10] sm:$0xff]
        %v366 = vld [vmem:[%s362 + $0x18] sm:$0xff]
        %v367 = vld [vmem:[%s362 + $0x20] sm:$0xff]
        %v368 = vld [vmem:[%s362 + $0x28] sm:$0xff]
        %v369 = vmul.f32 %v353, %v363
        %v370 = vmul.f32 %v354, %v364
        %v371 = vmul.f32 %v355, %v365
        %v372 = vmul.f32 %v356, %v366
        %v373 = vmul.f32 %v357, %v367
        %v374 = vmul.f32 %v358, %v368
        %v375 = vmul.f32 %v335, %v363
        %v376 = vmul.f32 %v336, %v364
        %v377 = vmul.f32 %v337, %v365
        %v378 = vmul.f32 %v338, %v366
        %v379 = vmul.f32 %v339, %v367
        %v380 = vmul.f32 %v340, %v368
        %v381 = vmul.f32 %v317, %v363
        %v382 = vmul.f32 %v318, %v364
        %v383 = vmul.f32 %v319, %v365
        %v384 = vmul.f32 %v320, %v366
        %v385 = vmul.f32 %v321, %v367
        %v386 = vmul.f32 %v322, %v368
        %v387 = vld [vmem:[%s239] sm:$0xff]
        %vm388 = vcmask 982016
        %v390 = vsel %vm388, %v387, 0
        %392 = vmatprep.subr.mxu0 %v270
        %393 = vmatpush1.msra.mxu0 %v269
        %394 = vmatprep.subr.mxu0 %v272
        %395 = vmatpush1.msra.mxu0 %v271
        %396 = vmatprep.subr.mxu0 %v274
        %397 = vmatpush1.msra.mxu0 %v273
        %398 = vmatprep.subr.mxu0 %v370
        %399 = vmatpush1.msra.mxu0 %v369
        %400 = vmatprep.subr.mxu0 %v372
        %401 = vmatpush1.msra.mxu0 %v371
        %402 = vmatprep.subr.mxu0 %v374
        %403 = vmatpush1.msra.mxu0 %v373
        %404 = vmatprep.subr.mxu0 %v376
        %405 = vmatpush1.msra.mxu0 %v375
        %406 = vmatprep.subr.mxu0 %v378
        %407 = vmatpush1.msra.mxu0 %v377
        %408 = vmatprep.subr.mxu0 %v380
        %409 = vmatpush1.msra.mxu0 %v379
        %410 = vmatprep.subr.mxu0 %v382
        %411 = vmatpush1.msra.mxu0 %v381
        %412 = vmatprep.subr.mxu0 %v384
        %413 = vmatpush1.msra.mxu0 %v383
        %414 = vmatprep.subr.mxu0 %v386
        %415 = vmatpush1.msra.mxu0 %v385
        %416 = vmatprep.subr.mxu0 %v364
        %417 = vmatpush1.msra.mxu0 %v363
        %418 = vmatprep.subr.mxu0 %v366
        %419 = vmatpush1.msra.mxu0 %v365
        %420 = vmatprep.subr.mxu0 %v368
        %421 = vmatpush1.msra.mxu0 %v367
        %422 = vmatprep.subr.mxu0 0.0
        %423 = vmatpush1.msra.mxu0 0.0
        %424 = vmatprep.subr.mxu0 0.0
        %425 = vmatpush1.msra.mxu0 0.0
        %426 = vmatprep.subr.mxu0 0.0
        %427 = vmatpush1.msra.mxu0 0.0
        %428 = vmatprep.subr.mxu0 0.0
        %429 = vmatpush1.msra.mxu0 0.0
        %430 = vmatprep.subr.mxu0 0.0
        %431 = vmatpush1.msra.mxu0 0.0
        %432 = vmatprep.subr.mxu0 0.0
        %433 = vmatpush1.msra.mxu0 0.0
        %434 = vmatprep.subr.mxu0 0.0
        %435 = vmatpush1.msra.mxu0 0.0
        %436 = vmatprep.subr.mxu0 0.0
        %437 = vmatpush1.msra.mxu0 0.0
        %438 = vmatprep.subr.mxu0 0.0
        %439 = vmatpush1.msra.mxu0 0.0
        %440 = vmatprep.subr.mxu0 0.0
        %441 = vmatpush1.msra.mxu0 0.0
        %442 = vmatprep.subr.mxu0 0.0
        %443 = vmatpush1.msra.mxu0 0.0
        %444 = vmatprep.subr.mxu0 0.0
        %445 = vmatpush1.msra.mxu0 0.0
        %446 = vmatprep.subr.mxu0 0.0
        %447 = vmatpush1.msra.mxu0 0.0
        %448 = vmatprep.subr.mxu0 0.0
        %449 = vmatpush1.msra.mxu0 0.0
        %450 = vmatprep.subr.mxu0 0.0
        %451 = vmatpush1.msra.mxu0 0.0
        %452 = vmatprep.subr.mxu0 0.0
        %453 = vmatpush1.msra.mxu0 0.0
        %454 = vmatprep.subr.mxu0 0.0
        %455 = vmatpush1.msra.mxu0 0.0
        %456 = vmatprep.mubr.f32.mxu0 0.0
        %457 = vmatmul.mubr.f32.gmra.mrb[0].mxu0 %v390
        %v458 = vpop.f32.mrb[0].mxu0
        %v459 = vadd.f32 0.0, %v458
        %v460 = vpop.f32.mrb[0].mxu0
        %v461 = vadd.f32 0.0, %v460
        %462 = vdwg.mxu0
        %s463 = smul.addr %s359, 8
        %s464 = scalar_lea.vmem [#allocation2], %s463
        %465 = vst [vmem:[%s464] sm:$0xff] %v459
        %466 = vst [vmem:[%s464 + $0x8] sm:$0xff] %v461
        %p467 = scmp.eq.s32.totalorder %s28, 0
        // Predicated region
        $region45: #{tpu_custom_call.1} parent=31 // pred_check
          %p468 = pneg %p467
        $region46: #{tpu_custom_call.1} parent=31 // pred_check_branch
          %470 = sbr.rel (%p468) target = $region48
        $region47: #{tpu_custom_call.1} parent=31 // pred_region
          %v471 = vld [vmem:[#allocation2] sm:$0xff]
          %v472 = vld [vmem:[#allocation2 + $0x8] sm:$0xff]
          %v473 = vlaneseq
          %v474 = vand.u32 %v473, 127
          %v475 = vadd.s32 %v474, 128
          %vm476 = vcmp.lt.s32.totalorder %v474, 256
          %vm477 = vcmp.lt.s32.totalorder %v475, 256
          %v478 = vsel %vm476, 1, 0
          %v479 = vsel %vm477, 1, 0
          %v480 = vcvt.s32.f32 %v478
          %v481 = vcvt.s32.f32 %v479
          %v482 = vmul.f32 %v471, %v480
          %v483 = vmul.f32 %v472, %v481
          %v484 = vadd.f32 %v482, %v483
          %485 = vadd.xlane.f32.xlu0 %v484
          %v486 = vpop.xlane.xlu0 %485
          %v487 = vmul.f32 %v486, 0.00390625
          %v488 = vsub.f32 %v471, %v487
          %v489 = vsub.f32 %v472, %v487
          %v490 = vmul.f32 %v488, %v488
          %v491 = vmul.f32 %v489, %v489
          %v492 = vmul.f32 %v490, %v480
          %v493 = vmul.f32 %v491, %v481
          %v494 = vadd.f32 %v492, %v493
          %495 = vadd.xlane.f32.xlu0 %v494
          %v496 = vpop.xlane.xlu0 %495
          %v497 = vmul.f32 %v496, 0.00390625
          %v498 = vadd.f32 %v497, 1e-05
          %v499 = vrsqrt.pop %v498
          %v500 = vmul.f32 %v488, %v499
          %v501 = vmul.f32 %v489, %v499
          %v502 = vxor.u32 %v500, 2147483648
          %v503 = vxor.u32 %v501, 2147483648
          %v504 = vmul.f32 %v502, 1.442695
          %v505 = vpow.pop %v504
          %v506 = vmul.f32 %v503, 1.442695
          %v507 = vpow.pop %v506
          %v508 = vadd.f32 %v505, 1.0
          %v509 = vadd.f32 %v507, 1.0
          %v510 = vrcp.pop %v508
          %v511 = vmul.f32 1.0, %v510
          %v512 = vrcp.pop %v509
          %v513 = vmul.f32 1.0, %v512
          %v514 = vmul.f32 %v500, %v511
          %v515 = vmul.f32 %v501, %v513
          %516 = vst [vmem:[%s266] sm:$0xff] %v514
          %517 = vst [vmem:[%s266 + $0x8] sm:$0xff] %v515
        $region48: #{tpu_custom_call.1} parent=31 // pred_fallthru
          _
        %s518 = sand.u32 %s127, 1
        %s519 = scalar_lea.sflag [#allocation5], %s518
        %s520 = sand.u32 %s127, 1
        %s521 = smul.addr %s520, 16
        %s522 = scalar_lea.vmem [#allocation9], %s521
        // Predicated region
        $region49: #{tpu_custom_call.1} parent=31 // pred_check
          %p523 = pneg %p137
        $region50: #{tpu_custom_call.1} parent=31 // pred_check_branch
          %525 = sbr.rel (%p523) target = $region52
        $region51: #{tpu_custom_call.1} parent=31 // pred_region
          %s527 = ssub.s32 256, 256
          %528 = vsyncadd %s519, %s527
          %s529 = smul.addr %s27, 2
          %s530 = smul.addr %s26, 4
          %s531 = sadd.s32 %s529, %s530
          %s532 = smul.addr %s531, 128
          %s533 = scalar_lea.hbm %s3, %s532
          %s535 = sshll.u32 %s522, 4
          %s536 = int_to_ptr.vmem [resolvable:$true] %s535
          %538 = dma.vmem_to_hbm [thread:$0]  %s536, 256, %s533, %s519
        $region52: #{tpu_custom_call.1} parent=31 // pred_fallthru
          _
      $region32: #{tpu_custom_call.1} parent=5 // pred_fallthru
        _
      %p539 = scmp.le.s32.totalorder 2, %s16
      // Predicated region
      $region53: #{tpu_custom_call.1} parent=5 // pred_check
        %p540 = pneg %p539
      $region54: #{tpu_custom_call.1} parent=5 // pred_check_branch
        %542 = sbr.rel (%p540) target = $region56
      $region55: #{tpu_custom_call.1} parent=5 // pred_region
        %s543 = ssub.s32 %s16, 2
        // Predicated region
        $region57: #{tpu_custom_call.1} parent=55 // pred_check
          %p544 = pneg %p143
        $region58: #{tpu_custom_call.1} parent=55 // pred_check_branch
          %546 = sbr.rel (%p544) target = $region60
        $region59: #{tpu_custom_call.1} parent=55 // pred_region
          %s547 = sand.u32 %s128, 1
          %s548 = scalar_lea.sflag [#allocation5], %s547
          %s549 = sand.u32 %s128, 1
          %s550 = smul.addr %s549, 16
          %s551 = scalar_lea.vmem [#allocation9], %s550
          %552 = dma.done %s548, 256
        $region60: #{tpu_custom_call.1} parent=55 // pred_fallthru
          _
      $region56: #{tpu_custom_call.1} parent=5 // pred_fallthru
        _
    $region6: #{tpu_custom_call.1} parent=1 // loop_footer
      %s20 = sadd.s32 1, %s16
    $region7: #{tpu_custom_call.1} parent=1 // loop_footer_branch
      %15 = sbr.rel target = $region3
    $region8: #{tpu_custom_call.1} parent=1 // loop_exit
      _
    %553 = vsyncpa [#allocation4], 1
    %s554 = scalar_lea.sflag [#allocation4], 1
    %555 = vsyncpa %s554, 1
    %556 = vsyncpa [#allocation7], 1
    %s557 = scalar_lea.sflag [#allocation7], 1
    %558 = vsyncpa %s557, 1
    %559 = vsyncpa [#allocation5], 1
    %s560 = scalar_lea.sflag [#allocation5], 1
    %561 = vsyncpa %s560, 1

</llo_original>
